<compile_context>
chip_gen: v5e
topology: v5e:2x2
jax: 0.10.0
libtpu: 0.0.40
codegen_flags: <defaults>
</compile_context>

<pallas_src>
import math

import jax
import jax.numpy as jnp
from jax import lax
from jax.experimental import pallas as pl
from jax.experimental.pallas import tpu as pltpu


def _round_up(x, m):
    return ((x + m - 1) // m) * m


def _geglu_kernel(x_ref, wx_ref, wg_ref, bx_ref, bg_ref, o_ref):
    x = x_ref[...]

    # Two MXU matmuls with f32 accumulation. Splitting the projection lets the
    # gate GELU epilogue (VPU/EUP work) overlap with the second matmul's MXU
    # pushes and keeps only (tm, tn) intermediates live.
    x_part = jnp.dot(x, wx_ref[...], preferred_element_type=jnp.float32) + bx_ref[...]
    gate = jnp.dot(x, wg_ref[...], preferred_element_type=jnp.float32) + bg_ref[...]

    # Exact GELU (matches torch.nn.functional.gelu default, approximate='none').
    inv_sqrt2 = jnp.float32(1.0 / math.sqrt(2.0))
    gelu_gate = 0.5 * gate * (1.0 + lax.erf(gate * inv_sqrt2))

    o_ref[...] = (x_part * gelu_gate).astype(o_ref.dtype)


def geglu(x, weight, bias, *, tm=256, tn=512):
    """GEGLU forward.

    Args:
      x:      (..., dim_in) activations.
      weight: (dim_in, 2*dim_out)  -- note: transposed vs. torch.nn.Linear.weight.
      bias:   (2*dim_out,)
      tm:     row tile (tokens per grid step); clamped/rounded internally.
      tn:     column tile per projection half; clamped/rounded internally.
    Returns:
      (..., dim_out)
    """
    dim_in, two_dim_out = weight.shape
    dim_out = two_dim_out // 2
    lead_shape = x.shape[:-1]
    M = math.prod(lead_shape) if lead_shape else 1
    x2d = x.reshape(M, dim_in)

    # Split projection into the linear half and the gate half so the N axis
    # can be tiled independently.
    w_x = weight[:, :dim_out]
    w_g = weight[:, dim_out:]
    b_x = bias[:dim_out].reshape(1, dim_out)
    b_g = bias[dim_out:].reshape(1, dim_out)

    # Tile sizes: rows in multiples of 8 (f32 sublanes), columns in multiples
    # of 128 (lanes). Clamp to the (padded) problem size for small shapes.
    tm = _round_up(max(8, min(tm, _round_up(M, 8))), 8)
    tn = _round_up(max(128, min(tn, _round_up(dim_out, 128))), 128)

    Mp = _round_up(M, tm)
    Np = _round_up(dim_out, tn)

    if Mp != M:
        x2d = jnp.pad(x2d, ((0, Mp - M), (0, 0)))
    if Np != dim_out:
        pad_n = Np - dim_out
        w_x = jnp.pad(w_x, ((0, 0), (0, pad_n)))
        w_g = jnp.pad(w_g, ((0, 0), (0, pad_n)))
        b_x = jnp.pad(b_x, ((0, 0), (0, pad_n)))
        b_g = jnp.pad(b_g, ((0, 0), (0, pad_n)))

    n_blocks = Np // tn
    m_blocks = Mp // tm

    itemsize = jnp.dtype(x.dtype).itemsize
    bias_itemsize = jnp.dtype(bias.dtype).itemsize
    # Conservative double-buffered per-step VMEM footprint.
    tile_vmem = (
        2 * tm * dim_in * itemsize          # x tile
        + 2 * 2 * dim_in * tn * itemsize    # W_x + W_gate tiles
        + 2 * 2 * tn * bias_itemsize        # bias tiles
        + 2 * tm * tn * itemsize            # output tile
    )
    # Headroom, but capped so the same config also fits v7x's 64 MiB VMEM.
    vmem_limit = int(min(max(2 * tile_vmem, 16 * 1024 * 1024), 48 * 1024 * 1024))

    cost = pl.CostEstimate(
        flops=2 * M * dim_in * 2 * dim_out,
        transcendentals=M * dim_out,
        bytes_accessed=(M * dim_in + dim_in * 2 * dim_out + 2 * dim_out + M * dim_out)
        * itemsize,
    )

    out = pl.pallas_call(
        _geglu_kernel,
        out_shape=jax.ShapeDtypeStruct((Mp, Np), x.dtype),
        grid_spec=pltpu.PrefetchScalarGridSpec(
            num_scalar_prefetch=0,
            # N (weight) axis outermost: the weight / bias block indices are
            # constant across the inner M loop, so they are DMA'd once per
            # N tile and stay resident (no per-step re-fetch).
            grid=(n_blocks, m_blocks),
            in_specs=[
                pl.BlockSpec((tm, dim_in), lambda j, i: (i, 0)),   # x
                pl.BlockSpec((dim_in, tn), lambda j, i: (0, j)),   # W_x
                pl.BlockSpec((dim_in, tn), lambda j, i: (0, j)),   # W_gate
                pl.BlockSpec((1, tn), lambda j, i: (0, j)),        # b_x
                pl.BlockSpec((1, tn), lambda j, i: (0, j)),        # b_gate
            ],
            out_specs=pl.BlockSpec((tm, tn), lambda j, i: (i, j)),
        ),
        compiler_params=pltpu.CompilerParams(
            dimension_semantics=("parallel", "parallel"),
            vmem_limit_bytes=vmem_limit,
        ),
        cost_estimate=cost,
    )(x2d, w_x, w_g, b_x, b_g)

    out = out[:M, :dim_out]
    return out.reshape(*lead_shape, dim_out)


def geglu_reference(x, weight, bias):
    proj = jnp.einsum("...k,kn->...n", x, weight) + bias
    dim_out = weight.shape[-1] // 2
    x_part, gate = proj[..., :dim_out], proj[..., dim_out:]
    return x_part * jax.nn.gelu(gate, approximate=False)


def _make_params(key, dim_in, dim_out, dtype=jnp.float32):
    kw, kb = jax.random.split(key)
    bound = 1.0 / math.sqrt(dim_in)
    weight = jax.random.uniform(
        kw, (dim_in, 2 * dim_out), minval=-bound, maxval=bound, dtype=dtype
    )
    bias = jax.random.uniform(
        kb, (2 * dim_out,), minval=-bound, maxval=bound, dtype=dtype
    )
    return weight, bias


if __name__ == "__main__":
    key = jax.random.PRNGKey(0)

    # Primary test: shapes consistent with the module: x of (batch, seq, dim_in).
    batch, seq, dim_in, dim_out = 2, 8, 32, 128
    k1, k2, k3 = jax.random.split(key, 3)
    x = jax.random.normal(k1, (batch, seq, dim_in), dtype=jnp.float32)
    weight, bias = _make_params(k2, dim_in, dim_out)

    out = jax.block_until_ready(geglu(x, weight, bias))
    ref = geglu_reference(x, weight, bias)
    assert out.shape == (batch, seq, dim_out), out.shape
    assert jnp.allclose(out, ref, atol=1e-5, rtol=1e-5), float(
        jnp.max(jnp.abs(out - ref))
    )

    # Ragged test: M not a multiple of 8 and dim_out not a multiple of 128
    # (exercises the pad / slice path).
    batch2, seq2, dim_in2, dim_out2 = 2, 7, 32, 192
    k4, k5 = jax.random.split(k3)
    x2 = jax.random.normal(k4, (batch2, seq2, dim_in2), dtype=jnp.float32)
    weight2, bias2 = _make_params(k5, dim_in2, dim_out2)

    out2 = jax.block_until_ready(geglu(x2, weight2, bias2))
    ref2 = geglu_reference(x2, weight2, bias2)
    assert out2.shape == (batch2, seq2, dim_out2), out2.shape
    assert jnp.allclose(out2, ref2, atol=1e-5, rtol=1e-5), float(
        jnp.max(jnp.abs(out2 - ref2))
    )

    print("KERNEL_OK")
</pallas_src>

<mosaic_0001>
module attributes {stable_mosaic.version = 11 : i64} {
  func.func @_geglu_kernel(%arg0: i32, %arg1: i32, %arg2: memref<16x32xf32, #tpu.memory_space<vmem>>, %arg3: memref<32x128xf32, #tpu.memory_space<vmem>>, %arg4: memref<32x128xf32, #tpu.memory_space<vmem>>, %arg5: memref<1x128xf32, #tpu.memory_space<vmem>>, %arg6: memref<1x128xf32, #tpu.memory_space<vmem>>, %arg7: memref<16x128xf32, #tpu.memory_space<vmem>>) attributes {dimension_semantics = [#tpu.dimension_semantics<parallel>, #tpu.dimension_semantics<parallel>], iteration_bounds = array<i64: 1, 1>, scalar_prefetch = 0 : i64, scratch_operands = 0 : i64, tpu.core_type = #tpu.core_type<tc>, window_params = [{transform_indices = @transform_0, window_bounds = array<i64: 16, 32>}, {transform_indices = @transform_1, window_bounds = array<i64: 32, 128>}, {transform_indices = @transform_2, window_bounds = array<i64: 32, 128>}, {transform_indices = @transform_3, window_bounds = array<i64: 1, 128>}, {transform_indices = @transform_4, window_bounds = array<i64: 1, 128>}, {transform_indices = @transform_5, window_bounds = array<i64: 16, 128>}]} {
    %c0 = arith.constant 0 : index
    %c0_0 = arith.constant 0 : index
    %0 = vector.load %arg2[%c0, %c0_0] : memref<16x32xf32, #tpu.memory_space<vmem>>, vector<16x32xf32>
    %c0_1 = arith.constant 0 : index
    %c0_2 = arith.constant 0 : index
    %1 = vector.load %arg3[%c0_1, %c0_2] : memref<32x128xf32, #tpu.memory_space<vmem>>, vector<32x128xf32>
    %cst = arith.constant dense<0.000000e+00> : vector<16x128xf32>
    %2 = tpu.matmul %0, %1, %cst {dimension_numbers = #tpu.dot_dimension_numbers<[1], [0], [0], [1], [0, 0, 1, 1], [], []>} : vector<16x32xf32>, vector<32x128xf32>, vector<16x128xf32> -> vector<16x128xf32>
    %c0_3 = arith.constant 0 : index
    %c0_4 = arith.constant 0 : index
    %3 = vector.load %arg5[%c0_3, %c0_4] : memref<1x128xf32, #tpu.memory_space<vmem>>, vector<1x128xf32>
    %4 = vector.broadcast %3 : vector<1x128xf32> to vector<16x128xf32>
    %5 = arith.addf %2, %4 : vector<16x128xf32>
    %c0_5 = arith.constant 0 : index
    %c0_6 = arith.constant 0 : index
    %6 = vector.load %arg4[%c0_5, %c0_6] : memref<32x128xf32, #tpu.memory_space<vmem>>, vector<32x128xf32>
    %cst_7 = arith.constant dense<0.000000e+00> : vector<16x128xf32>
    %7 = tpu.matmul %0, %6, %cst_7 {dimension_numbers = #tpu.dot_dimension_numbers<[1], [0], [0], [1], [0, 0, 1, 1], [], []>} : vector<16x32xf32>, vector<32x128xf32>, vector<16x128xf32> -> vector<16x128xf32>
    %c0_8 = arith.constant 0 : index
    %c0_9 = arith.constant 0 : index
    %8 = vector.load %arg6[%c0_8, %c0_9] : memref<1x128xf32, #tpu.memory_space<vmem>>, vector<1x128xf32>
    %9 = vector.broadcast %8 : vector<1x128xf32> to vector<16x128xf32>
    %10 = arith.addf %7, %9 : vector<16x128xf32>
    %cst_10 = arith.constant 5.000000e-01 : f32
    %11 = vector.broadcast %cst_10 : f32 to vector<16x128xf32>
    %12 = arith.mulf %11, %10 : vector<16x128xf32>
    %cst_11 = arith.constant 0.707106769 : f32
    %13 = vector.broadcast %cst_11 : f32 to vector<16x128xf32>
    %14 = arith.mulf %10, %13 : vector<16x128xf32>
    %15 = math.erf %14 : vector<16x128xf32>
    %cst_12 = arith.constant 1.000000e+00 : f32
    %16 = vector.broadcast %cst_12 : f32 to vector<16x128xf32>
    %17 = arith.addf %16, %15 : vector<16x128xf32>
    %18 = arith.mulf %12, %17 : vector<16x128xf32>
    %19 = arith.mulf %5, %18 : vector<16x128xf32>
    %c0_13 = arith.constant 0 : index
    %c0_14 = arith.constant 0 : index
    %20 = vector.load %arg7[%c0_13, %c0_14] : memref<16x128xf32, #tpu.memory_space<vmem>>, vector<16x128xf32>
    tpu.vector_store %arg7[%c0_13, %c0_14], %19 {strides = array<i32>} : memref<16x128xf32, #tpu.memory_space<vmem>>, vector<16x128xf32>,
    return
  }
  func.func @transform_0(%arg0: i32, %arg1: i32) -> (i32, i32) {
    %c0_i32 = arith.constant 0 : i32
    %c0_i32_0 = arith.constant 0 : i32
    return %arg1, %c0_i32 : i32, i32
  }
  func.func @transform_1(%arg0: i32, %arg1: i32) -> (i32, i32) {
    %c0_i32 = arith.constant 0 : i32
    %c0_i32_0 = arith.constant 0 : i32
    return %c0_i32, %arg0 : i32, i32
  }
  func.func @transform_2(%arg0: i32, %arg1: i32) -> (i32, i32) {
    %c0_i32 = arith.constant 0 : i32
    %c0_i32_0 = arith.constant 0 : i32
    return %c0_i32, %arg0 : i32, i32
  }
  func.func @transform_3(%arg0: i32, %arg1: i32) -> (i32, i32) {
    %c0_i32 = arith.constant 0 : i32
    %c0_i32_0 = arith.constant 0 : i32
    return %c0_i32, %arg0 : i32, i32
  }
  func.func @transform_4(%arg0: i32, %arg1: i32) -> (i32, i32) {
    %c0_i32 = arith.constant 0 : i32
    %c0_i32_0 = arith.constant 0 : i32
    return %c0_i32, %arg0 : i32, i32
  }
  func.func @transform_5(%arg0: i32, %arg1: i32) -> (i32, i32) {
    %c0_i32 = arith.constant 0 : i32
    return %arg1, %arg0 : i32, i32
  }
}

</mosaic_0001>

<llo_original>
// kernel: tpu_custom_call.1
$region0: #{tpu_custom_call.1}
  #allocation0 [shape = 'u32[]', space=smem, size = 0x4, offset = 0x4, fixed_abs, tag = 'smem constant byte address 0x4 - core index']
  #allocation1 [shape = 'u32[72,128]{1,0:T(1,128)}', space=vmem, size = 0x9000, scoped, tag = 'internal scratch']
  %s0 = inlined_call_operand.hbm [shape: f32[16,32], index: 0, kind: input, shape index: {}]
  %s1 = inlined_call_operand.hbm [shape: f32[32,128], index: 1, kind: input, shape index: {}]
  %s2 = inlined_call_operand.hbm [shape: f32[32,128], index: 2, kind: input, shape index: {}]
  %s3 = inlined_call_operand.vmem [shape: f32[1,128], index: 3, kind: input, shape index: {}]
  %s4 = inlined_call_operand.vmem [shape: f32[1,128], index: 4, kind: input, shape index: {}]
  %s5 = inlined_call_operand.hbm [shape: f32[16,128], index: 5, kind: output, shape index: {}]
  %s6 = sld [smem:[#allocation0]]
  $region42: #{tpu_custom_call.1} parent=0
    _
  %s8 = ssub.s32 1, %s6
  %s9 = scalar_select 0, %s8, %s6
  $region1: #{tpu_custom_call.1} parent=0
    #allocation2 [shape = 'u8[8192]{0}', space=vmem, size = 0x2000, scoped, tag = 'input window, operand 0, single buffered']
    #allocation3 [shape = 's32[1]{0}', space=sflag, size = 0x4, scoped, tag = 'scoped memory for tpu_custom_call.1']
    #allocation4 [shape = 's32[1]{0}', space=sflag, size = 0x4, scoped, tag = 'scoped memory for tpu_custom_call.1']
    #allocation5 [shape = 'u8[16384]{0}', space=vmem, size = 0x4000, scoped, tag = 'input window, operand 1, single buffered']
    #allocation6 [shape = 's32[1]{0}', space=sflag, size = 0x4, scoped, tag = 'scoped memory for tpu_custom_call.1']
    #allocation7 [shape = 'u8[16384]{0}', space=vmem, size = 0x4000, scoped, tag = 'input window, operand 2, single buffered']
    #allocation8 [shape = 'u8[8192]{0}', space=vmem, size = 0x2000, scoped, tag = 'output window, operand 0, single buffered']
    %10 = vsyncpa [#allocation3], 0
    %11 = vsyncpa [#allocation6], 0
    %12 = vsyncpa [#allocation4], 0
    // Predicated region
    $region2: #{tpu_custom_call.1} parent=1 // pred_check
      _
    $region3: #{tpu_custom_call.1} parent=1 // pred_check_branch
      %14 = sbr.rel (0) target = $region5
    $region4: #{tpu_custom_call.1} parent=1 // pred_region
      %16 = vsyncadd [#allocation3], 0
      %s17 = sshll.u32 %s0, 4
      %s18 = int_to_ptr.hbm [resolvable:$true] %s17
      %s19 = sshll.u32 [#allocation2], 4
      %s20 = int_to_ptr.vmem [resolvable:$true] %s19
      %25 = dma.hbm_to_vmem [thread:$0]  %s18, 256, %s20, [#allocation3], 128, 128, 8
    $region5: #{tpu_custom_call.1} parent=1 // pred_fallthru
      _
    // Predicated region
    $region6: #{tpu_custom_call.1} parent=1 // pred_check
      _
    $region7: #{tpu_custom_call.1} parent=1 // pred_check_branch
      %27 = sbr.rel (0) target = $region9
    $region8: #{tpu_custom_call.1} parent=1 // pred_region
      %29 = vsyncadd [#allocation6], 0
      %s30 = sshll.u32 %s1, 4
      %s31 = int_to_ptr.hbm [resolvable:$true] %s30
      %s32 = sshll.u32 [#allocation5], 4
      %s33 = int_to_ptr.vmem [resolvable:$true] %s32
      %38 = dma.hbm_to_vmem [thread:$0]  %s31, 512, %s33, [#allocation6], 128, 128, 8
    $region9: #{tpu_custom_call.1} parent=1 // pred_fallthru
      _
    // Predicated region
    $region10: #{tpu_custom_call.1} parent=1 // pred_check
      _
    $region11: #{tpu_custom_call.1} parent=1 // pred_check_branch
      %40 = sbr.rel (0) target = $region13
    $region12: #{tpu_custom_call.1} parent=1 // pred_region
      %42 = vsyncadd [#allocation6], 0
      %s43 = sshll.u32 %s2, 4
      %s44 = int_to_ptr.hbm [resolvable:$true] %s43
      %s45 = sshll.u32 [#allocation7], 4
      %s46 = int_to_ptr.vmem [resolvable:$true] %s45
      %51 = dma.hbm_to_vmem [thread:$0]  %s44, 512, %s46, [#allocation6], 128, 128, 8
    $region13: #{tpu_custom_call.1} parent=1 // pred_fallthru
      _
    // Predicated region
    $region14: #{tpu_custom_call.1} parent=1 // pred_check
      _
    $region15: #{tpu_custom_call.1} parent=1 // pred_check_branch
      %53 = sbr.rel (0) target = $region17
    $region16: #{tpu_custom_call.1} parent=1 // pred_region
      _
    $region17: #{tpu_custom_call.1} parent=1 // pred_fallthru
      _
    // Predicated region
    $region18: #{tpu_custom_call.1} parent=1 // pred_check
      _
    $region19: #{tpu_custom_call.1} parent=1 // pred_check_branch
      %55 = sbr.rel (0) target = $region21
    $region20: #{tpu_custom_call.1} parent=1 // pred_region
      _
    $region21: #{tpu_custom_call.1} parent=1 // pred_fallthru
      _
    // Predicated region
    $region22: #{tpu_custom_call.1} parent=1 // pred_check
      _
    $region23: #{tpu_custom_call.1} parent=1 // pred_check_branch
      %57 = sbr.rel (0) target = $region25
    $region24: #{tpu_custom_call.1} parent=1 // pred_region
      %59 = dma.done [#allocation3], 256
    $region25: #{tpu_custom_call.1} parent=1 // pred_fallthru
      _
    // Predicated region
    $region26: #{tpu_custom_call.1} parent=1 // pred_check
      _
    $region27: #{tpu_custom_call.1} parent=1 // pred_check_branch
      %61 = sbr.rel (0) target = $region29
    $region28: #{tpu_custom_call.1} parent=1 // pred_region
      %63 = dma.done [#allocation6], 512
    $region29: #{tpu_custom_call.1} parent=1 // pred_fallthru
      _
    // Predicated region
    $region30: #{tpu_custom_call.1} parent=1 // pred_check
      _
    $region31: #{tpu_custom_call.1} parent=1 // pred_check_branch
      %65 = sbr.rel (0) target = $region33
    $region32: #{tpu_custom_call.1} parent=1 // pred_region
      %67 = dma.done [#allocation6], 512
    $region33: #{tpu_custom_call.1} parent=1 // pred_fallthru
      _
    %v68 = vld [vmem:[#allocation2] sm:$0xff]
    %v69 = vld [vmem:[#allocation2 + $0x8] sm:$0xff]
    %v70 = vld [vmem:[#allocation5] sm:$0xff]
    %v71 = vld [vmem:[#allocation5 + $0x8] sm:$0xff]
    %v72 = vld [vmem:[#allocation5 + $0x10] sm:$0xff]
    %v73 = vld [vmem:[#allocation5 + $0x18] sm:$0xff]
    %v74 = vld [vmem:[%s3] sm:$0x1]
    %v76 = vperm.slane %v74, 0
    %vm78 = vcmask 261120
    %v80 = vsel %vm78, %v68, 0
    %v83 = vsel %vm78, %v69, 0
    %85 = vmatpush.msra.mxu0 0.0
    %86 = vmatpush.msra.mxu0 0.0
    %87 = vmatpush.msra.mxu0 0.0
    %88 = vmatpush.msra.mxu0 0.0
    %89 = vmatpush.msra.mxu0 0.0
    %90 = vmatpush.msra.mxu0 0.0
    %91 = vmatpush.msra.mxu0 0.0
    %92 = vmatpush.msra.mxu0 0.0
    %93 = vmatpush.msra.mxu0 0.0
    %94 = vmatpush.msra.mxu0 0.0
    %95 = vmatpush.msra.mxu0 0.0
    %96 = vmatpush.msra.mxu0 0.0
    %97 = vmatpush.msra.mxu0 %v73
    %98 = vmatpush.msra.mxu0 %v72
    %99 = vmatpush.msra.mxu0 %v71
    %100 = vmatpush.msra.mxu0 %v70
    %101 = vmatmul.f32.gmra.mxu0 %v80
    %v102 = vpop.f32.mrf.mxu0
    %v103 = vadd.f32 %v76, %v102
    %104 = vmatmul.f32.gmra.mxu0 %v83
    %v105 = vpop.f32.mrf.mxu0
    %v106 = vadd.f32 %v76, %v105
    %107 = vdwg.mxu0
    %v108 = vld [vmem:[#allocation7] sm:$0xff]
    %v109 = vld [vmem:[#allocation7 + $0x8] sm:$0xff]
    %v110 = vld [vmem:[#allocation7 + $0x10] sm:$0xff]
    %v111 = vld [vmem:[#allocation7 + $0x18] sm:$0xff]
    %v112 = vld [vmem:[%s4] sm:$0x1]
    %v114 = vperm.slane %v112, 0
    %116 = vmatpush.msra.mxu0 0.0
    %117 = vmatpush.msra.mxu0 0.0
    %118 = vmatpush.msra.mxu0 0.0
    %119 = vmatpush.msra.mxu0 0.0
    %120 = vmatpush.msra.mxu0 0.0
    %121 = vmatpush.msra.mxu0 0.0
    %122 = vmatpush.msra.mxu0 0.0
    %123 = vmatpush.msra.mxu0 0.0
    %124 = vmatpush.msra.mxu0 0.0
    %125 = vmatpush.msra.mxu0 0.0
    %126 = vmatpush.msra.mxu0 0.0
    %127 = vmatpush.msra.mxu0 0.0
    %128 = vmatpush.msra.mxu0 %v111
    %129 = vmatpush.msra.mxu0 %v110
    %130 = vmatpush.msra.mxu0 %v109
    %131 = vmatpush.msra.mxu0 %v108
    %132 = vmatmul.f32.gmra.mxu0 %v80
    %v133 = vpop.f32.mrf.mxu0
    %v134 = vadd.f32 %v114, %v133
    %135 = vmatmul.f32.gmra.mxu0 %v83
    %v136 = vpop.f32.mrf.mxu0
    %v137 = vadd.f32 %v114, %v136
    %138 = vdwg.mxu0
    %v139 = vmul.f32 %v134, 0.5
    %v140 = vmul.f32 %v137, 0.5
    %v141 = vmul.f32 %v134, 0.70710677
    %v142 = vmul.f32 %v137, 0.70710677
    %v143 = vmul.f32 %v141, %v141
    %v144 = vmin.f32 16.0, %v143
    %v145 = vmul.f32 %v144, 2.1237322e-06
    %v146 = vadd.f32 %v145, 0.00028619796
    %v147 = vmul.f32 %v144, %v146
    %v148 = vadd.f32 %v147, 0.0036580483
    %v149 = vmul.f32 %v144, %v148
    %v150 = vadd.f32 %v149, 0.05243302
    %v151 = vmul.f32 %v144, %v150
    %v152 = vadd.f32 %v151, 0.18741608
    %v153 = vmul.f32 %v144, %v152
    %v154 = vadd.f32 %v153, 1.1283791
    %v155 = vmul.f32 %v141, %v154
    %v156 = vmul.f32 %v144, 3.8918573e-05
    %v157 = vadd.f32 %v156, 0.001143296
    %v158 = vmul.f32 %v144, %v157
    %v159 = vadd.f32 %v158, 0.014752088
    %v160 = vmul.f32 %v144, %v159
    %v161 = vadd.f32 %v160, 0.112945676
    %v162 = vmul.f32 %v144, %v161
    %v163 = vadd.f32 %v162, 0.4994258
    %v164 = vmul.f32 %v144, %v163
    %v165 = vadd.f32 %v164, 1.0
    %v166 = vrcp.pop %v165
    %v167 = vmul.f32 %v165, %v166
    %v168 = vsub.f32 1.0, %v167
    %v169 = vmul.f32 %v166, %v168
    %v170 = vadd.f32 %v166, %v169
    %vm171 = vweird.f32 %v165
    %vm172 = vweird.f32 %v166
    %vm173 = vmor %vm171, %vm172
    %v174 = vsel %vm173, %v166, %v170
    %v175 = vand.u32 2147483647, %v165
    %vm176 = vcmp.eq.f32.partialorder %v175, 8.507059e+37
    %v177 = vand.u32 %v165, 2147483648
    %v178 = vor.u32 1.1754944e-38, %v177
    %v179 = vsel %vm176, %v178, %v174
    %v180 = vmul.f32 %v155, %v179
    %v181 = vmin.f32 %v180, 1.0
    %v182 = vmax.f32 %v181, -1.0
    %v183 = vmul.f32 %v142, %v142
    %v184 = vmin.f32 16.0, %v183
    %v185 = vmul.f32 %v184, 2.1237322e-06
    %v186 = vadd.f32 %v185, 0.00028619796
    %v187 = vmul.f32 %v184, %v186
    %v188 = vadd.f32 %v187, 0.0036580483
    %v189 = vmul.f32 %v184, %v188
    %v190 = vadd.f32 %v189, 0.05243302
    %v191 = vmul.f32 %v184, %v190
    %v192 = vadd.f32 %v191, 0.18741608
    %v193 = vmul.f32 %v184, %v192
    %v194 = vadd.f32 %v193, 1.1283791
    %v195 = vmul.f32 %v142, %v194
    %v196 = vmul.f32 %v184, 3.8918573e-05
    %v197 = vadd.f32 %v196, 0.001143296
    %v198 = vmul.f32 %v184, %v197
    %v199 = vadd.f32 %v198, 0.014752088
    %v200 = vmul.f32 %v184, %v199
    %v201 = vadd.f32 %v200, 0.112945676
    %v202 = vmul.f32 %v184, %v201
    %v203 = vadd.f32 %v202, 0.4994258
    %v204 = vmul.f32 %v184, %v203
    %v205 = vadd.f32 %v204, 1.0
    %v206 = vrcp.pop %v205
    %v207 = vmul.f32 %v205, %v206
    %v208 = vsub.f32 1.0, %v207
    %v209 = vmul.f32 %v206, %v208
    %v210 = vadd.f32 %v206, %v209
    %vm211 = vweird.f32 %v205
    %vm212 = vweird.f32 %v206
    %vm213 = vmor %vm211, %vm212
    %v214 = vsel %vm213, %v206, %v210
    %v215 = vand.u32 2147483647, %v205
    %vm216 = vcmp.eq.f32.partialorder %v215, 8.507059e+37
    %v217 = vand.u32 %v205, 2147483648
    %v218 = vor.u32 1.1754944e-38, %v217
    %v219 = vsel %vm216, %v218, %v214
    %v220 = vmul.f32 %v195, %v219
    %v221 = vmin.f32 %v220, 1.0
    %v222 = vmax.f32 %v221, -1.0
    %v223 = vadd.f32 %v182, 1.0
    %v224 = vadd.f32 %v222, 1.0
    %v225 = vmul.f32 %v139, %v223
    %v226 = vmul.f32 %v140, %v224
    %v227 = vmul.f32 %v103, %v225
    %v228 = vmul.f32 %v106, %v226
    %229 = vst [vmem:[#allocation8] sm:$0xff] %v227
    %230 = vst [vmem:[#allocation8 + $0x8] sm:$0xff] %v228
    // Predicated region
    $region34: #{tpu_custom_call.1} parent=1 // pred_check
      _
    $region35: #{tpu_custom_call.1} parent=1 // pred_check_branch
      %232 = sbr.rel (0) target = $region37
    $region36: #{tpu_custom_call.1} parent=1 // pred_region
      %234 = vsyncadd [#allocation4], 0
      %s235 = sshll.u32 [#allocation8], 4
      %s236 = int_to_ptr.vmem [resolvable:$true] %s235
      %s237 = sshll.u32 %s5, 4
      %s238 = int_to_ptr.hbm [resolvable:$true] %s237
      %243 = dma.vmem_to_hbm [thread:$0]  %s236, 256, %s238, [#allocation4], 128, 128, 8
    $region37: #{tpu_custom_call.1} parent=1 // pred_fallthru
      _
    // Predicated region
    $region38: #{tpu_custom_call.1} parent=1 // pred_check
      _
    $region39: #{tpu_custom_call.1} parent=1 // pred_check_branch
      %245 = sbr.rel (0) target = $region41
    $region40: #{tpu_custom_call.1} parent=1 // pred_region
      %247 = dma.done [#allocation4], 256
    $region41: #{tpu_custom_call.1} parent=1 // pred_fallthru
      _
    %248 = vsyncpa [#allocation3], 1
    %249 = vsyncpa [#allocation6], 1
    %250 = vsyncpa [#allocation4], 1

</llo_original>
